<compile_context>
chip_gen: v7x
topology: tpu7x:2x2x1
jax: 0.10.0
libtpu: 0.0.40
codegen_flags: <defaults>
</compile_context>

<pallas_src>
import math

import jax
import jax.numpy as jnp
from jax.experimental import pallas as pl
from jax.experimental.pallas import tpu as pltpu


def _make_positional_encoding(d_model: int, max_seq_length: int) -> jnp.ndarray:
    """Deterministic sin/cos positional-encoding table, shape (1, max_seq_length, d_model)."""
    position = jnp.arange(0, max_seq_length, dtype=jnp.float32)[:, None]          # (S, 1)
    div_term = jnp.exp(
        jnp.arange(0, d_model, 2, dtype=jnp.float32) * -(math.log(10000.0) / d_model)
    )                                                                              # (D/2,)
    angles = position * div_term                                                   # (S, D/2)
    pe = jnp.zeros((max_seq_length, d_model), dtype=jnp.float32)
    pe = pe.at[:, 0::2].set(jnp.sin(angles))
    pe = pe.at[:, 1::2].set(jnp.cos(angles))
    return pe[None, :, :]                                                          # (1, S, D)


def _add_pe_kernel(x_ref, pe_ref, o_ref):
    # Pure elementwise broadcast-add on a (TS, D) VMEM tile -- HBM-bandwidth bound.
    o_ref[...] = x_ref[...] + pe_ref[...]


def _pick_seq_tile(S: int, D: int, itemsize: int, target_bytes: int = 2 << 20) -> int:
    """Largest multiple-of-8 divisor of S whose (TS, D) tile stays ~<= target_bytes."""
    if S % 8 != 0:
        # Full-extent block is always legal under the (8,128) rule.
        return S
    max_rows = max(8, target_bytes // max(D * itemsize, 1))
    best = 8
    for ts in range(8, min(S, int(max_rows)) + 1, 8):
        if S % ts == 0:
            best = ts
    return best


def _tiled_add(x3: jnp.ndarray, pe3: jnp.ndarray) -> jnp.ndarray:
    """x3: (B, S, D); pe3: (1, S_pe, D) with S_pe >= S. Returns x3 + pe3[:, :S]."""
    B, S, D = x3.shape
    itemsize = jnp.dtype(x3.dtype).itemsize
    ts = _pick_seq_tile(S, D, itemsize)
    grid = (S // ts, B)  # S-tiles OUTER, batch INNER -> pe tile reused across batches

    return pl.pallas_call(
        _add_pe_kernel,
        out_shape=jax.ShapeDtypeStruct((B, S, D), x3.dtype),
        grid_spec=pltpu.PrefetchScalarGridSpec(
            num_scalar_prefetch=0,
            grid=grid,
            in_specs=[
                # x tile: (TS, D) rows of this batch.
                pl.BlockSpec((pl.Squeezed(), ts, D), lambda s, b: (b, s, 0)),
                # pe tile: selected from the FULL table by block index s
                # (independent of b -> same block index across the inner batch
                # loop, so Pallas skips the re-DMA).
                pl.BlockSpec((pl.Squeezed(), ts, D), lambda s, b: (0, s, 0)),
            ],
            out_specs=pl.BlockSpec((pl.Squeezed(), ts, D), lambda s, b: (b, s, 0)),
        ),
        compiler_params=pltpu.CompilerParams(
            # Every output block is written exactly once -> both axes are parallel
            # (lets megacore / v7x's 2 TCs shard the streaming work).
            dimension_semantics=("parallel", "parallel"),
        ),
        # NOTE: input_output_aliases={0: 0} could donate x to halve peak HBM
        # allocation at long-sequence inference; omitted here so the demo can
        # reuse x for the reference check.
    )(x3, pe3)


def positional_encoding_forward(x: jnp.ndarray, pe: jnp.ndarray) -> jnp.ndarray:
    """x: (B, S, D); pe: (1, max_seq_length, D). Returns x + pe[:, :S] in x.dtype."""
    B, S, D = x.shape
    pe = pe.astype(x.dtype)  # match dtype: halves pe traffic, no convert in hot loop

    if D % 128 != 0 and (S * D) % 128 == 0:
        # Lane-dense repack: present a 128-wide minor dim so stores are unmasked
        # full vst (biggest measured lever for mem-bound elementwise kernels).
        rows = (S * D) // 128
        x_l = x.reshape(B, rows, 128)
        pe_l = pe[:, :S, :].reshape(1, rows, 128)  # glue: slice + repack the table
        return _tiled_add(x_l, pe_l).reshape(B, S, D)

    # D already lane-friendly (or cannot be repacked): pass the full pe table and
    # let the BlockSpec index_map pick the first S rows (no HBM slice copy).
    return _tiled_add(x, pe)


if __name__ == "__main__":
    key = jax.random.PRNGKey(0)

    # Primary demo: small shapes consistent with the module (d_model=512, max_seq_length=100).
    batch, seq, d_model_demo, max_len_demo = 2, 8, 512, 100
    x = jax.random.normal(key, (batch, seq, d_model_demo), dtype=jnp.float32)
    pe = _make_positional_encoding(d_model_demo, max_len_demo)

    out = jax.block_until_ready(positional_encoding_forward(x, pe))
    ref = x + pe[:, :seq, :]
    assert out.shape == (batch, seq, d_model_demo)
    assert jnp.allclose(out, ref, atol=1e-6), "mismatch vs reference (lane-aligned path)"

    # Also exercise the lane-dense repack path (d_model not a multiple of 128).
    d_small = 32
    x2 = jax.random.normal(jax.random.PRNGKey(1), (batch, seq, d_small), dtype=jnp.float32)
    pe2 = _make_positional_encoding(d_small, max_len_demo)
    out2 = jax.block_until_ready(positional_encoding_forward(x2, pe2))
    ref2 = x2 + pe2[:, :seq, :]
    assert jnp.allclose(out2, ref2, atol=1e-6), "mismatch vs reference (repacked path)"

    print("KERNEL_OK")
</pallas_src>

<mosaic_0001>
module attributes {stable_mosaic.version = 11 : i64} {
  func.func @_add_pe_kernel(%arg0: i32, %arg1: i32, %arg2: memref<1x8x512xf32, #tpu.memory_space<vmem>>, %arg3: memref<1x8x512xf32, #tpu.memory_space<vmem>>, %arg4: memref<1x8x512xf32, #tpu.memory_space<vmem>>) attributes {dimension_semantics = [#tpu.dimension_semantics<parallel>, #tpu.dimension_semantics<parallel>], iteration_bounds = array<i64: 1, 2>, scalar_prefetch = 0 : i64, scratch_operands = 0 : i64, tpu.core_type = #tpu.core_type<tc>, window_params = [{transform_indices = @transform_0, window_bounds = array<i64: 1, 8, 512>}, {transform_indices = @transform_1, window_bounds = array<i64: 1, 8, 512>}, {transform_indices = @transform_2, window_bounds = array<i64: 1, 8, 512>}]} {
    %c0 = arith.constant 0 : index
    %c0_0 = arith.constant 0 : index
    %c0_1 = arith.constant 0 : index
    %0 = vector.load %arg2[%c0, %c0_0, %c0_1] : memref<1x8x512xf32, #tpu.memory_space<vmem>>, vector<1x8x512xf32>
    %1 = vector.shape_cast %0 : vector<1x8x512xf32> to vector<8x512xf32>
    %c0_2 = arith.constant 0 : index
    %c0_3 = arith.constant 0 : index
    %c0_4 = arith.constant 0 : index
    %2 = vector.load %arg3[%c0_2, %c0_3, %c0_4] : memref<1x8x512xf32, #tpu.memory_space<vmem>>, vector<1x8x512xf32>
    %3 = vector.shape_cast %2 : vector<1x8x512xf32> to vector<8x512xf32>
    %4 = arith.addf %1, %3 : vector<8x512xf32>
    %c0_5 = arith.constant 0 : index
    %c0_6 = arith.constant 0 : index
    %c0_7 = arith.constant 0 : index
    %5 = vector.load %arg4[%c0_5, %c0_6, %c0_7] : memref<1x8x512xf32, #tpu.memory_space<vmem>>, vector<1x8x512xf32>
    %6 = vector.shape_cast %5 : vector<1x8x512xf32> to vector<8x512xf32>
    %7 = vector.shape_cast %4 : vector<8x512xf32> to vector<1x8x512xf32>
    tpu.vector_store %arg4[%c0_5, %c0_6, %c0_7], %7 {strides = array<i32>} : memref<1x8x512xf32, #tpu.memory_space<vmem>>, vector<1x8x512xf32>,
    return
  }
  func.func @transform_0(%arg0: i32, %arg1: i32) -> (i32, i32, i32) {
    %c0_i32 = arith.constant 0 : i32
    %c0_i32_0 = arith.constant 0 : i32
    return %arg1, %arg0, %c0_i32 : i32, i32, i32
  }
  func.func @transform_1(%arg0: i32, %arg1: i32) -> (i32, i32, i32) {
    %c0_i32 = arith.constant 0 : i32
    %c0_i32_0 = arith.constant 0 : i32
    %c0_i32_1 = arith.constant 0 : i32
    return %c0_i32, %arg0, %c0_i32_0 : i32, i32, i32
  }
  func.func @transform_2(%arg0: i32, %arg1: i32) -> (i32, i32, i32) {
    %c0_i32 = arith.constant 0 : i32
    %c0_i32_0 = arith.constant 0 : i32
    return %arg1, %arg0, %c0_i32 : i32, i32, i32
  }
}

</mosaic_0001>

<llo_original>
// kernel: tpu_custom_call.1
$region0: #{tpu_custom_call.1}
  #allocation0 [shape = 'u32[]', space=smem, size = 0x4, offset = 0x4, fixed_abs, tag = 'smem constant byte address 0x4 - core index']
  #allocation1 [shape = 'u32[144,128]{1,0:T(1,128)}', space=vmem, size = 0x12000, scoped, tag = 'internal scratch']
  %s0 = inlined_call_operand.vmem [shape: f32[2,8,512], index: 0, kind: input, shape index: {}]
  %s1 = inlined_call_operand.vmem [shape: f32[1,100,512], index: 1, kind: input, shape index: {}]
  %s2 = inlined_call_operand.hbm [shape: f32[2,8,512], index: 2, kind: output, shape index: {}]
  %s3 = sld [smem:[#allocation0]]
  $region41: #{tpu_custom_call.1} parent=0
    _
  %s5 = ssub.s32 1, %s3
  %s6 = scalar_select 0, %s5, %s3
  $region1: #{tpu_custom_call.1} parent=0
    #allocation2 [shape = 'u8[32768]{0}', space=vmem, size = 0x8000, scoped, tag = 'output window, operand 0']
    #allocation3 [shape = 's32[2]{0}', space=sflag, size = 0x8, scoped, tag = 'scoped memory for tpu_custom_call.1']
    %7 = vsyncpa [#allocation3], 0
    %s8 = scalar_lea.sflag [#allocation3], 1
    %9 = vsyncpa %s8, 0
    loop: start=0, step=1, limit=4
    $region2: #{tpu_custom_call.1} parent=1 // loop_pre_header
      _
    $region3: #{tpu_custom_call.1} parent=1 // loop_header
      %s11 = sphi 0, %s15
      %p12 = scmp.ge.s32.totalorder %s11, 4
      %s18 = sphi 0, %s30
      %s19 = sphi 0, %s26
      %s20 = sphi 0, %s18
      %s21 = sphi 0, %s19
      %s22 = sphi 0, %s20
      %s23 = sphi 0, %s21
      %s35 = sphi 0, %s37
      %s38 = sphi 0, %s35
      %s39 = sphi 0, %s38
      %s55 = sphi 0, %s39
      %s61 = sphi 0, %s63
      %s64 = sphi 0, %s61
      %s65 = sphi 0, %s64
      %s81 = sphi 0, %s65
      %s89 = sphi 0, %s91
      %s92 = sphi 0, %s89
      %s93 = sphi 0, %s92
      %s109 = sphi 0, %s93
    $region4: #{tpu_custom_call.1} parent=1 // loop_header_branch
      %14 = sbr.rel (%p12) target = $region8
    $region5: #{tpu_custom_call.1} parent=1 // loop_body
      %s16 = ssub.s32 %s11, 1
      %s17 = ssub.s32 %s11, 2
      %s24 = sadd.s32 1, %s19
      %p25 = scmp.ge.s32.totalorder %s24, 2
      %s26 = scalar_select %p25, 0, %s24
      %s27 = sadd.s32 1, %s18
      %s28 = scalar_select %p25, %s27, %s18
      %p29 = scmp.ge.s32.totalorder %s28, 1
      %s30 = scalar_select %p29, 0, %s28
      %s31 = ssub.s32 %s19, %s26
      %s32 = ssub.s32 %s18, %s30
      %s33 = sor.u32 %s31, %s32
      %p34 = scmp.eq.s32.totalorder %s33, 0
      %s36 = sadd.s32 %s35, 1
      %s37 = scalar_select %p34, %s35, %s36
      %p40 = pneg %p34
      %p41 = scmp.eq.s32.totalorder %s11, 1
      %p42 = por %p40, %p41
      %p43 = scmp.ne.s32.totalorder %s35, %s38
      %p44 = scmp.eq.s32.totalorder %s11, 0
      %p45 = por %p43, %p44
      %p46 = scmp.ne.s32.totalorder %s35, %s38
      %p47 = scmp.eq.s32.totalorder %s16, 1
      %p48 = por %p46, %p47
      %p49 = scmp.ne.s32.totalorder %s38, %s39
      %p50 = scmp.eq.s32.totalorder %s16, 0
      %p51 = por %p49, %p50
      %p52 = scmp.ne.s32.totalorder %s38, %s39
      %p53 = scmp.eq.s32.totalorder %s17, 1
      %p54 = por %p52, %p53
      %p56 = scmp.ne.s32.totalorder %s39, %s55
      %p57 = scmp.eq.s32.totalorder %s17, 0
      %p58 = por %p56, %p57
      %s59 = ssub.s32 %s18, %s30
      %p60 = scmp.eq.s32.totalorder %s59, 0
      %s62 = sadd.s32 %s61, 1
      %s63 = scalar_select %p60, %s61, %s62
      %p66 = pneg %p60
      %p67 = scmp.eq.s32.totalorder %s11, 1
      %p68 = por %p66, %p67
      %p69 = scmp.ne.s32.totalorder %s61, %s64
      %p70 = scmp.eq.s32.totalorder %s11, 0
      %p71 = por %p69, %p70
      %p72 = scmp.ne.s32.totalorder %s61, %s64
      %p73 = scmp.eq.s32.totalorder %s16, 1
      %p74 = por %p72, %p73
      %p75 = scmp.ne.s32.totalorder %s64, %s65
      %p76 = scmp.eq.s32.totalorder %s16, 0
      %p77 = por %p75, %p76
      %p78 = scmp.ne.s32.totalorder %s64, %s65
      %p79 = scmp.eq.s32.totalorder %s17, 1
      %p80 = por %p78, %p79
      %p82 = scmp.ne.s32.totalorder %s65, %s81
      %p83 = scmp.eq.s32.totalorder %s17, 0
      %p84 = por %p82, %p83
      %s85 = ssub.s32 %s19, %s26
      %s86 = ssub.s32 %s18, %s30
      %s87 = sor.u32 %s85, %s86
      %p88 = scmp.eq.s32.totalorder %s87, 0
      %s90 = sadd.s32 %s89, 1
      %s91 = scalar_select %p88, %s89, %s90
      %p94 = pneg %p88
      %p95 = scmp.eq.s32.totalorder %s11, 1
      %p96 = por %p94, %p95
      %p97 = scmp.ne.s32.totalorder %s89, %s92
      %p98 = scmp.eq.s32.totalorder %s11, 0
      %p99 = por %p97, %p98
      %p100 = scmp.ne.s32.totalorder %s89, %s92
      %p101 = scmp.eq.s32.totalorder %s16, 1
      %p102 = por %p100, %p101
      %p103 = scmp.ne.s32.totalorder %s92, %s93
      %p104 = scmp.eq.s32.totalorder %s16, 0
      %p105 = por %p103, %p104
      %p106 = scmp.ne.s32.totalorder %s92, %s93
      %p107 = scmp.eq.s32.totalorder %s17, 1
      %p108 = por %p106, %p107
      %p110 = scmp.ne.s32.totalorder %s93, %s109
      %p111 = scmp.eq.s32.totalorder %s17, 0
      %p112 = por %p110, %p111
      %p113 = scmp.le.s32.totalorder 1, %s11
      %p114 = scmp.lt.s32.totalorder %s11, 3
      %p115 = pnand %p113, %p114
      %p116 = pneg %p115
      // Predicated region
      $region9: #{tpu_custom_call.1} parent=5 // pred_check
        _
      $region10: #{tpu_custom_call.1} parent=5 // pred_check_branch
        %118 = sbr.rel (%p115) target = $region12
      $region11: #{tpu_custom_call.1} parent=5 // pred_region
        %s119 = ssub.s32 %s11, 1
        // Predicated region
        $region13: #{tpu_custom_call.1} parent=11 // pred_check
          %p120 = pneg %p77
        $region14: #{tpu_custom_call.1} parent=11 // pred_check_branch
          %122 = sbr.rel (%p120) target = $region16
        $region15: #{tpu_custom_call.1} parent=11 // pred_region
          %p123 = scmp.lt.s32.totalorder %s20, 12
          %s124 = scalar_select %p123, %s20, 12
          %s125 = smul.addr %s124, 4
          %s126 = smul.addr %s125, 8
          %s127 = scalar_lea.vmem %s1, %s126
        $region16: #{tpu_custom_call.1} parent=11 // pred_fallthru
          _
      $region12: #{tpu_custom_call.1} parent=5 // pred_fallthru
        _
      %p128 = scmp.lt.s32.totalorder %s11, 2
      // Predicated region
      $region17: #{tpu_custom_call.1} parent=5 // pred_check
        %p129 = pneg %p128
      $region18: #{tpu_custom_call.1} parent=5 // pred_check_branch
        %131 = sbr.rel (%p129) target = $region20
      $region19: #{tpu_custom_call.1} parent=5 // pred_region
        // Predicated region
        $region21: #{tpu_custom_call.1} parent=19 // pred_check
          %p132 = pneg %p45
        $region22: #{tpu_custom_call.1} parent=19 // pred_check_branch
          %134 = sbr.rel (%p132) target = $region24
        $region23: #{tpu_custom_call.1} parent=19 // pred_region
          %p135 = scmp.lt.s32.totalorder %s19, 1
          %s136 = scalar_select %p135, %s19, 1
          %p137 = scmp.lt.s32.totalorder %s18, 0
          %s138 = scalar_select %p137, %s18, 0
          %s139 = smul.addr %s138, 4
          %s140 = smul.addr %s136, 4
          %s141 = sadd.s32 %s139, %s140
          %s142 = smul.addr %s141, 8
          %s143 = scalar_lea.vmem %s0, %s142
        $region24: #{tpu_custom_call.1} parent=19 // pred_fallthru
          _
      $region20: #{tpu_custom_call.1} parent=5 // pred_fallthru
        _
      %p144 = scmp.le.s32.totalorder 1, %s11
      %p145 = scmp.lt.s32.totalorder %s11, 3
      %p146 = pnand %p144, %p145
      %p147 = pneg %p146
      // Predicated region
      $region25: #{tpu_custom_call.1} parent=5 // pred_check
        _
      $region26: #{tpu_custom_call.1} parent=5 // pred_check_branch
        %149 = sbr.rel (%p146) target = $region28
      $region27: #{tpu_custom_call.1} parent=5 // pred_region
        %s150 = ssub.s32 %s11, 1
        %p151 = scmp.lt.s32.totalorder %s21, 1
        %s152 = scalar_select %p151, %s21, 1
        %p153 = scmp.lt.s32.totalorder %s20, 0
        %s154 = scalar_select %p153, %s20, 0
        %s155 = smul.addr %s154, 4
        %s156 = smul.addr %s152, 4
        %s157 = sadd.s32 %s155, %s156
        %s158 = smul.addr %s157, 8
        %s159 = scalar_lea.vmem %s0, %s158
        %p160 = pneg %p51
        %p161 = pneg %p48
        %p162 = scmp.lt.s32.totalorder %s20, 12
        %s163 = scalar_select %p162, %s20, 12
        %s164 = smul.addr %s163, 4
        %s165 = smul.addr %s164, 8
        %s166 = scalar_lea.vmem %s1, %s165
        %p167 = pneg %p77
        %p168 = pneg %p74
        %p169 = pneg %p105
        %p170 = pneg %p102
        %s171 = sand.u32 %s92, 1
        %s172 = scalar_lea.sflag [#allocation3], %s171
        %s173 = sand.u32 %s92, 1
        %s174 = smul.addr %s173, 32
        %s175 = scalar_lea.vmem [#allocation2], %s174
        %p176 = scmp.lt.s32.totalorder %s21, 1
        %s177 = scalar_select %p176, %s21, 1
        %p178 = scmp.lt.s32.totalorder %s20, 0
        %s179 = scalar_select %p178, %s20, 0
        %s180 = smul.addr %s179, 4
        %s181 = smul.addr %s177, 4
        %s182 = sadd.s32 %s180, %s181
        %s183 = smul.addr %s182, 8
        %s184 = scalar_lea.vmem %s0, %s183
        %p185 = scmp.lt.s32.totalorder %s20, 12
        %s186 = scalar_select %p185, %s20, 12
        %s187 = smul.addr %s186, 4
        %s188 = smul.addr %s187, 8
        %s189 = scalar_lea.vmem %s1, %s188
        %v190 = vld [vmem:[%s184] sm:$0xff]
        %v191 = vld [vmem:[%s184 + $0x8] sm:$0xff]
        %v192 = vld [vmem:[%s184 + $0x10] sm:$0xff]
        %v193 = vld [vmem:[%s184 + $0x18] sm:$0xff]
        %v194 = vld [vmem:[%s189] sm:$0xff]
        %v195 = vld [vmem:[%s189 + $0x8] sm:$0xff]
        %v196 = vld [vmem:[%s189 + $0x10] sm:$0xff]
        %v197 = vld [vmem:[%s189 + $0x18] sm:$0xff]
        %v198 = vadd.f32 %v190, %v194
        %v199 = vadd.f32 %v191, %v195
        %v200 = vadd.f32 %v192, %v196
        %v201 = vadd.f32 %v193, %v197
        %202 = vst [vmem:[%s175] sm:$0xff] %v198
        %203 = vst [vmem:[%s175 + $0x8] sm:$0xff] %v199
        %204 = vst [vmem:[%s175 + $0x10] sm:$0xff] %v200
        %205 = vst [vmem:[%s175 + $0x18] sm:$0xff] %v201
        %s206 = sand.u32 %s92, 1
        %s207 = scalar_lea.sflag [#allocation3], %s206
        %s208 = sand.u32 %s92, 1
        %s209 = smul.addr %s208, 32
        %s210 = scalar_lea.vmem [#allocation2], %s209
        // Predicated region
        $region29: #{tpu_custom_call.1} parent=27 // pred_check
          %p211 = pneg %p102
        $region30: #{tpu_custom_call.1} parent=27 // pred_check_branch
          %213 = sbr.rel (%p211) target = $region32
        $region31: #{tpu_custom_call.1} parent=27 // pred_region
          %s215 = ssub.s32 512, 512
          %216 = vsyncadd %s207, %s215
          %s217 = smul.addr %s20, 4
          %s218 = smul.addr %s21, 4
          %s219 = sadd.s32 %s217, %s218
          %s220 = smul.addr %s219, 128
          %s221 = scalar_lea.hbm %s2, %s220
          %s223 = sshll.u32 %s210, 4
          %s224 = int_to_ptr.vmem [resolvable:$true] %s223
          %226 = dma.vmem_to_hbm [thread:$0]  %s224, 512, %s221, %s207
        $region32: #{tpu_custom_call.1} parent=27 // pred_fallthru
          _
      $region28: #{tpu_custom_call.1} parent=5 // pred_fallthru
        _
      %p227 = scmp.le.s32.totalorder 2, %s11
      // Predicated region
      $region33: #{tpu_custom_call.1} parent=5 // pred_check
        %p228 = pneg %p227
      $region34: #{tpu_custom_call.1} parent=5 // pred_check_branch
        %230 = sbr.rel (%p228) target = $region36
      $region35: #{tpu_custom_call.1} parent=5 // pred_region
        %s231 = ssub.s32 %s11, 2
        // Predicated region
        $region37: #{tpu_custom_call.1} parent=35 // pred_check
          %p232 = pneg %p108
        $region38: #{tpu_custom_call.1} parent=35 // pred_check_branch
          %234 = sbr.rel (%p232) target = $region40
        $region39: #{tpu_custom_call.1} parent=35 // pred_region
          %s235 = sand.u32 %s93, 1
          %s236 = scalar_lea.sflag [#allocation3], %s235
          %s237 = sand.u32 %s93, 1
          %s238 = smul.addr %s237, 32
          %s239 = scalar_lea.vmem [#allocation2], %s238
          %240 = dma.done %s236, 512
        $region40: #{tpu_custom_call.1} parent=35 // pred_fallthru
          _
      $region36: #{tpu_custom_call.1} parent=5 // pred_fallthru
        _
    $region6: #{tpu_custom_call.1} parent=1 // loop_footer
      %s15 = sadd.s32 1, %s11
    $region7: #{tpu_custom_call.1} parent=1 // loop_footer_branch
      %10 = sbr.rel target = $region3
    $region8: #{tpu_custom_call.1} parent=1 // loop_exit
      _
    %241 = vsyncpa [#allocation3], 1
    %s242 = scalar_lea.sflag [#allocation3], 1
    %243 = vsyncpa %s242, 1

</llo_original>
